<compile_context>
chip_gen: v5e
topology: v5e:2x2
jax: 0.10.0
libtpu: 0.0.40
codegen_flags: <defaults>
</compile_context>

<pallas_src>
import functools

import jax
import jax.numpy as jnp
from jax.experimental import pallas as pl
from jax.experimental.pallas import tpu as pltpu


def _round_up(x, m):
    return ((x + m - 1) // m) * m


# ----------------------------------------------------------------------------
# Kernel: one lane-dense matmul tile per grid step.
#   p_ref : (1, m_tile, K_pad)      bf16   folded patches (taps*Cin on lanes)
#   w_ref : (K_pad, cout_pad)       bf16   flattened weights (resident)
#   b_ref : (1, cout_pad)           f32
#   o_ref : (1, m_tile, cout_pad)   out_dtype
# ----------------------------------------------------------------------------
def _conv_mm_kernel(p_ref, w_ref, b_ref, o_ref):
    acc = jnp.dot(p_ref[0], w_ref[...], preferred_element_type=jnp.float32)
    o_ref[0] = (acc + b_ref[...]).astype(o_ref.dtype)


# ----------------------------------------------------------------------------
# ConvLayer forward: ReflectionPad2d(k//2) -> Conv2d(k, stride) with bias
# ----------------------------------------------------------------------------
def conv_layer_forward(x, weight, bias, *, stride, m_tile=256,
                       out_dtype=jnp.float32):
    """x: (N, Cin, H, W) f32; weight: (Cout, Cin, KH, KW); bias: (Cout,).

    Returns (N, Cout, OH, OW) in `out_dtype` (f32 default; pass bf16 when the
    consumer takes bf16 to halve output HBM writeback).
    """
    N, Cin, H, W = x.shape
    Cout, _, KH, KW = weight.shape
    s = stride
    # TODO(synk): assumes a square, odd kernel (as the GAN model uses); even
    # or rectangular kernels would need asymmetric padding handling.
    pad = KH // 2

    # ReflectionPad2d (matches torch semantics), then NHWC + bf16 once.
    x_pad = jnp.pad(x, ((0, 0), (0, 0), (pad, pad), (pad, pad)), mode="reflect")
    Hp, Wp = H + 2 * pad, W + 2 * pad
    OH = (Hp - KH) // s + 1
    OW = (Wp - KW) // s + 1
    M = OH * OW
    # Guard (per review): every tap slice must stay inside the padded image.
    assert (OH - 1) * s + KH - 1 <= Hp - 1, (OH, s, KH, Hp)
    assert (OW - 1) * s + KW - 1 <= Wp - 1, (OW, s, KW, Wp)

    x_nhwc = jnp.transpose(x_pad, (0, 2, 3, 1)).astype(jnp.bfloat16)

    # Host-side tap fold: one strided slice per tap, concatenated on the lane
    # (channel) axis -> (N, OH, OW, KH*KW*Cin).  XLA fuses pad / transpose /
    # cast / slice / concat into a single pass that writes the patch tensor.
    taps = []
    for kh in range(KH):
        for kw in range(KW):
            taps.append(x_nhwc[:, kh:kh + (OH - 1) * s + 1:s,
                               kw:kw + (OW - 1) * s + 1:s, :])
    patches = jnp.concatenate(taps, axis=-1)          # (N, OH, OW, K)
    K = KH * KW * Cin

    # Lane-dense padding.  For the small-Cin stem (K < 128) pad lanes to 128
    # so LHS rows are full-lane loads; otherwise a multiple of 8 is enough.
    # Padded K rows are zero and contribute nothing to the contraction.
    K_pad = 128 if K < 128 else _round_up(K, 8)
    cout_pad = _round_up(Cout, 128)

    # M (= OH*OW) tiling: one lane-dense (m_tile, cout_pad) slab per step.
    m_tile = max(8, _round_up(m_tile, 8))
    m_tile = min(m_tile, _round_up(M, 8))
    M_pad = _round_up(M, m_tile)

    patches = patches.reshape(N, M, K)
    patches = jnp.pad(patches, ((0, 0), (0, M_pad - M), (0, K_pad - K)))

    # (K_pad, cout_pad) weights in tap-major, channel-minor order to match
    # the patch concat; bf16 operands, f32 accumulation in the kernel.
    w_flat = jnp.transpose(weight, (2, 3, 1, 0)).reshape(K, Cout)
    w_flat = jnp.pad(w_flat, ((0, K_pad - K), (0, cout_pad - Cout)))
    w_flat = w_flat.astype(jnp.bfloat16)
    b_pad = jnp.pad(bias, (0, cout_pad - Cout)).astype(jnp.float32)
    b_pad = b_pad.reshape(1, cout_pad)

    out = pl.pallas_call(
        _conv_mm_kernel,
        out_shape=jax.ShapeDtypeStruct((N, M_pad, cout_pad), out_dtype),
        grid_spec=pltpu.PrefetchScalarGridSpec(
            num_scalar_prefetch=0,
            grid=(N, M_pad // m_tile),
            in_specs=[
                # per-step patch tile
                pl.BlockSpec((1, m_tile, K_pad), lambda n, m: (n, m, 0)),
                # weights / bias resident across the whole grid
                pl.BlockSpec((K_pad, cout_pad), lambda n, m: (0, 0)),
                pl.BlockSpec((1, cout_pad), lambda n, m: (0, 0)),
            ],
            out_specs=pl.BlockSpec((1, m_tile, cout_pad),
                                   lambda n, m: (n, m, 0)),
        ),
        compiler_params=pltpu.CompilerParams(
            dimension_semantics=("parallel", "parallel")),
    )(patches, w_flat, b_pad)

    out = out[:, :M, :Cout].reshape(N, OH, OW, Cout)
    return jnp.transpose(out, (0, 3, 1, 2))  # NCHW


# ----------------------------------------------------------------------------
# Deterministic parameter init (mimics torch.nn.Conv2d default init)
# ----------------------------------------------------------------------------
def init_conv_params(key, in_channels, out_channels, kernel_size):
    kw, kb = jax.random.split(key)
    fan_in = in_channels * kernel_size * kernel_size
    bound = 1.0 / jnp.sqrt(fan_in)
    weight = jax.random.uniform(
        kw, (out_channels, in_channels, kernel_size, kernel_size),
        minval=-bound, maxval=bound, dtype=jnp.float32)
    bias = jax.random.uniform(
        kb, (out_channels,), minval=-bound, maxval=bound, dtype=jnp.float32)
    return weight, bias


if __name__ == "__main__":
    key = jax.random.PRNGKey(0)
    k_x, k_p = jax.random.split(key)

    # ConvLayer(4, 8, kernel_size=3, stride=2) on a small input.
    N, Cin, H, W = 2, 4, 16, 16
    Cout, ksize, stride = 8, 3, 2

    x = jax.random.normal(k_x, (N, Cin, H, W), dtype=jnp.float32)
    weight, bias = init_conv_params(k_p, Cin, Cout, ksize)

    fwd = jax.jit(functools.partial(conv_layer_forward, stride=stride))
    out = jax.block_until_ready(fwd(x, weight, bias))

    # Reference: reflection pad + lax conv with the same bf16-operand /
    # f32-accumulation numerics as the kernel.
    pad = ksize // 2
    x_pad = jnp.pad(x, ((0, 0), (0, 0), (pad, pad), (pad, pad)), mode="reflect")
    ref = jax.lax.conv_general_dilated(
        x_pad.astype(jnp.bfloat16), weight.astype(jnp.bfloat16),
        window_strides=(stride, stride), padding="VALID",
        dimension_numbers=("NCHW", "OIHW", "NCHW"),
        preferred_element_type=jnp.float32)
    ref = ref + bias.reshape(1, Cout, 1, 1)

    assert out.shape == ref.shape, (out.shape, ref.shape)
    max_err = float(jnp.max(jnp.abs(out - ref)))
    assert max_err < 2e-3, max_err

    print("KERNEL_OK")
</pallas_src>

<mosaic_0001>
module attributes {stable_mosaic.version = 11 : i64} {
  func.func @_conv_mm_kernel(%arg0: i32, %arg1: i32, %arg2: memref<1x64x128xbf16, #tpu.memory_space<vmem>>, %arg3: memref<128x128xbf16, #tpu.memory_space<vmem>>, %arg4: memref<1x128xf32, #tpu.memory_space<vmem>>, %arg5: memref<1x64x128xf32, #tpu.memory_space<vmem>>) attributes {dimension_semantics = [#tpu.dimension_semantics<parallel>, #tpu.dimension_semantics<parallel>], iteration_bounds = array<i64: 2, 1>, scalar_prefetch = 0 : i64, scratch_operands = 0 : i64, tpu.core_type = #tpu.core_type<tc>, window_params = [{transform_indices = @transform_0, window_bounds = array<i64: 1, 64, 128>}, {pipeline_mode = #tpu.pipeline_mode<synchronous>, transform_indices = @transform_1, window_bounds = array<i64: 128, 128>}, {pipeline_mode = #tpu.pipeline_mode<synchronous>, transform_indices = @transform_2, window_bounds = array<i64: 1, 128>}, {transform_indices = @transform_3, window_bounds = array<i64: 1, 64, 128>}]} {
    %c0 = arith.constant 0 : index
    %c0_0 = arith.constant 0 : index
    %c0_1 = arith.constant 0 : index
    %0 = vector.load %arg2[%c0, %c0_0, %c0_1] : memref<1x64x128xbf16, #tpu.memory_space<vmem>>, vector<1x64x128xbf16>
    %1 = vector.shape_cast %0 : vector<1x64x128xbf16> to vector<64x128xbf16>
    %c0_2 = arith.constant 0 : index
    %c0_3 = arith.constant 0 : index
    %2 = vector.load %arg3[%c0_2, %c0_3] : memref<128x128xbf16, #tpu.memory_space<vmem>>, vector<128x128xbf16>
    %cst = arith.constant dense<0.000000e+00> : vector<64x128xf32>
    %3 = tpu.matmul %1, %2, %cst {dimension_numbers = #tpu.dot_dimension_numbers<[1], [0], [0], [1], [0, 0, 1, 1], [], []>} : vector<64x128xbf16>, vector<128x128xbf16>, vector<64x128xf32> -> vector<64x128xf32>
    %c0_4 = arith.constant 0 : index
    %c0_5 = arith.constant 0 : index
    %4 = vector.load %arg4[%c0_4, %c0_5] : memref<1x128xf32, #tpu.memory_space<vmem>>, vector<1x128xf32>
    %5 = vector.broadcast %4 : vector<1x128xf32> to vector<64x128xf32>
    %6 = arith.addf %3, %5 : vector<64x128xf32>
    %c0_6 = arith.constant 0 : index
    %c0_7 = arith.constant 0 : index
    %c0_8 = arith.constant 0 : index
    %7 = vector.load %arg5[%c0_6, %c0_7, %c0_8] : memref<1x64x128xf32, #tpu.memory_space<vmem>>, vector<1x64x128xf32>
    %8 = vector.shape_cast %7 : vector<1x64x128xf32> to vector<64x128xf32>
    %9 = vector.shape_cast %6 : vector<64x128xf32> to vector<1x64x128xf32>
    tpu.vector_store %arg5[%c0_6, %c0_7, %c0_8], %9 {strides = array<i32>} : memref<1x64x128xf32, #tpu.memory_space<vmem>>, vector<1x64x128xf32>,
    return
  }
  func.func @transform_0(%arg0: i32, %arg1: i32) -> (i32, i32, i32) {
    %c0_i32 = arith.constant 0 : i32
    %c0_i32_0 = arith.constant 0 : i32
    return %arg0, %arg1, %c0_i32 : i32, i32, i32
  }
  func.func @transform_1(%arg0: i32, %arg1: i32) -> (i32, i32) {
    %c0_i32 = arith.constant 0 : i32
    %c0_i32_0 = arith.constant 0 : i32
    %c0_i32_1 = arith.constant 0 : i32
    return %c0_i32, %c0_i32_0 : i32, i32
  }
  func.func @transform_2(%arg0: i32, %arg1: i32) -> (i32, i32) {
    %c0_i32 = arith.constant 0 : i32
    %c0_i32_0 = arith.constant 0 : i32
    %c0_i32_1 = arith.constant 0 : i32
    return %c0_i32, %c0_i32_0 : i32, i32
  }
  func.func @transform_3(%arg0: i32, %arg1: i32) -> (i32, i32, i32) {
    %c0_i32 = arith.constant 0 : i32
    %c0_i32_0 = arith.constant 0 : i32
    return %arg0, %arg1, %c0_i32 : i32, i32, i32
  }
}

</mosaic_0001>

<llo_original>
// kernel: conv_layer_forward.1
$region0: #{conv_layer_forward.1}
  #allocation0 [shape = 'u32[]', space=smem, size = 0x4, offset = 0x4, fixed_abs, tag = 'smem constant byte address 0x4 - core index']
  #allocation1 [shape = 'u32[72,128]{1,0:T(1,128)}', space=vmem, size = 0x9000, scoped, tag = 'internal scratch']
  %s0 = inlined_call_operand.vmem [shape: bf16[2,64,128], index: 0, kind: input, shape index: {}]
  %s1 = inlined_call_operand.vmem [shape: bf16[128,128], index: 1, kind: input, shape index: {}]
  %s2 = inlined_call_operand.vmem [shape: f32[1,128], index: 2, kind: input, shape index: {}]
  %s3 = inlined_call_operand.vmem [shape: f32[2,64,128], index: 3, kind: output, shape index: {}]
  %s4 = sld [smem:[#allocation0]]
  $region45: #{conv_layer_forward.1} parent=0
    _
  %s6 = ssub.s32 1, %s4
  %s7 = scalar_select 0, %s6, %s4
  loop: start=0, step=1, limit=4
  $region2: #{conv_layer_forward.1} parent=0 // loop_pre_header
    _
  $region3: #{conv_layer_forward.1} parent=0 // loop_header
    %s9 = sphi 0, %s13
    %p10 = scmp.ge.s32.totalorder %s9, 4
    %s16 = sphi 0, %s28
    %s17 = sphi 0, %s24
    %s18 = sphi 0, %s16
    %s19 = sphi 0, %s17
    %s20 = sphi 0, %s18
    %s21 = sphi 0, %s19
    %s33 = sphi 0, %s35
    %s36 = sphi 0, %s33
    %s37 = sphi 0, %s36
    %s53 = sphi 0, %s37
    %s57 = sphi 0, %s57
    %s59 = sphi 0, %s57
    %s60 = sphi 0, %s59
    %s74 = sphi 0, %s60
    %s78 = sphi 0, %s78
    %s80 = sphi 0, %s78
    %s81 = sphi 0, %s80
    %s95 = sphi 0, %s81
    %s103 = sphi 0, %s105
    %s106 = sphi 0, %s103
    %s107 = sphi 0, %s106
    %s123 = sphi 0, %s107
  $region4: #{conv_layer_forward.1} parent=0 // loop_header_branch
    %12 = sbr.rel (%p10) target = $region8
  $region5: #{conv_layer_forward.1} parent=0 // loop_body
    %s14 = ssub.s32 %s9, 1
    %s15 = ssub.s32 %s9, 2
    %s22 = sadd.s32 1, %s17
    %p23 = scmp.ge.s32.totalorder %s22, 1
    %s24 = scalar_select %p23, 0, %s22
    %s25 = sadd.s32 1, %s16
    %s26 = scalar_select %p23, %s25, %s16
    %p27 = scmp.ge.s32.totalorder %s26, 2
    %s28 = scalar_select %p27, 0, %s26
    %s29 = ssub.s32 %s16, %s28
    %s30 = ssub.s32 %s17, %s24
    %s31 = sor.u32 %s29, %s30
    %p32 = scmp.eq.s32.totalorder %s31, 0
    %s34 = sadd.s32 %s33, 1
    %s35 = scalar_select %p32, %s33, %s34
    %p38 = pneg %p32
    %p39 = scmp.eq.s32.totalorder %s9, 1
    %p40 = por %p38, %p39
    %p41 = scmp.ne.s32.totalorder %s33, %s36
    %p42 = scmp.eq.s32.totalorder %s9, 0
    %p43 = por %p41, %p42
    %p44 = scmp.ne.s32.totalorder %s33, %s36
    %p45 = scmp.eq.s32.totalorder %s14, 1
    %p46 = por %p44, %p45
    %p47 = scmp.ne.s32.totalorder %s36, %s37
    %p48 = scmp.eq.s32.totalorder %s14, 0
    %p49 = por %p47, %p48
    %p50 = scmp.ne.s32.totalorder %s36, %s37
    %p51 = scmp.eq.s32.totalorder %s15, 1
    %p52 = por %p50, %p51
    %p54 = scmp.ne.s32.totalorder %s37, %s53
    %p55 = scmp.eq.s32.totalorder %s15, 0
    %p56 = por %p54, %p55
    %s58 = sadd.s32 %s57, 1
    %p61 = scmp.eq.s32.totalorder %s9, 1
    %p62 = scmp.ne.s32.totalorder %s57, %s59
    %p63 = scmp.eq.s32.totalorder %s9, 0
    %p64 = por %p62, %p63
    %p65 = scmp.ne.s32.totalorder %s57, %s59
    %p66 = scmp.eq.s32.totalorder %s14, 1
    %p67 = por %p65, %p66
    %p68 = scmp.ne.s32.totalorder %s59, %s60
    %p69 = scmp.eq.s32.totalorder %s14, 0
    %p70 = por %p68, %p69
    %p71 = scmp.ne.s32.totalorder %s59, %s60
    %p72 = scmp.eq.s32.totalorder %s15, 1
    %p73 = por %p71, %p72
    %p75 = scmp.ne.s32.totalorder %s60, %s74
    %p76 = scmp.eq.s32.totalorder %s15, 0
    %p77 = por %p75, %p76
    %s79 = sadd.s32 %s78, 1
    %p82 = scmp.eq.s32.totalorder %s9, 1
    %p83 = scmp.ne.s32.totalorder %s78, %s80
    %p84 = scmp.eq.s32.totalorder %s9, 0
    %p85 = por %p83, %p84
    %p86 = scmp.ne.s32.totalorder %s78, %s80
    %p87 = scmp.eq.s32.totalorder %s14, 1
    %p88 = por %p86, %p87
    %p89 = scmp.ne.s32.totalorder %s80, %s81
    %p90 = scmp.eq.s32.totalorder %s14, 0
    %p91 = por %p89, %p90
    %p92 = scmp.ne.s32.totalorder %s80, %s81
    %p93 = scmp.eq.s32.totalorder %s15, 1
    %p94 = por %p92, %p93
    %p96 = scmp.ne.s32.totalorder %s81, %s95
    %p97 = scmp.eq.s32.totalorder %s15, 0
    %p98 = por %p96, %p97
    %s99 = ssub.s32 %s16, %s28
    %s100 = ssub.s32 %s17, %s24
    %s101 = sor.u32 %s99, %s100
    %p102 = scmp.eq.s32.totalorder %s101, 0
    %s104 = sadd.s32 %s103, 1
    %s105 = scalar_select %p102, %s103, %s104
    %p108 = pneg %p102
    %p109 = scmp.eq.s32.totalorder %s9, 1
    %p110 = por %p108, %p109
    %p111 = scmp.ne.s32.totalorder %s103, %s106
    %p112 = scmp.eq.s32.totalorder %s9, 0
    %p113 = por %p111, %p112
    %p114 = scmp.ne.s32.totalorder %s103, %s106
    %p115 = scmp.eq.s32.totalorder %s14, 1
    %p116 = por %p114, %p115
    %p117 = scmp.ne.s32.totalorder %s106, %s107
    %p118 = scmp.eq.s32.totalorder %s14, 0
    %p119 = por %p117, %p118
    %p120 = scmp.ne.s32.totalorder %s106, %s107
    %p121 = scmp.eq.s32.totalorder %s15, 1
    %p122 = por %p120, %p121
    %p124 = scmp.ne.s32.totalorder %s107, %s123
    %p125 = scmp.eq.s32.totalorder %s15, 0
    %p126 = por %p124, %p125
    %p127 = scmp.le.s32.totalorder 1, %s9
    %p128 = scmp.lt.s32.totalorder %s9, 3
    %p129 = pnand %p127, %p128
    %p130 = pneg %p129
    // Predicated region
    $region9: #{conv_layer_forward.1} parent=5 // pred_check
      _
    $region10: #{conv_layer_forward.1} parent=5 // pred_check_branch
      %132 = sbr.rel (%p129) target = $region12
    $region11: #{conv_layer_forward.1} parent=5 // pred_region
      %s133 = ssub.s32 %s9, 1
      // Predicated region
      $region13: #{conv_layer_forward.1} parent=11 // pred_check
        %p134 = pneg %p70
      $region14: #{conv_layer_forward.1} parent=11 // pred_check_branch
        %136 = sbr.rel (%p134) target = $region16
      $region15: #{conv_layer_forward.1} parent=11 // pred_region
        _
      $region16: #{conv_layer_forward.1} parent=11 // pred_fallthru
        _
      // Predicated region
      $region17: #{conv_layer_forward.1} parent=11 // pred_check
        %p137 = pneg %p91
      $region18: #{conv_layer_forward.1} parent=11 // pred_check_branch
        %139 = sbr.rel (%p137) target = $region20
      $region19: #{conv_layer_forward.1} parent=11 // pred_region
        _
      $region20: #{conv_layer_forward.1} parent=11 // pred_fallthru
        _
    $region12: #{conv_layer_forward.1} parent=5 // pred_fallthru
      _
    %p140 = scmp.lt.s32.totalorder %s9, 2
    // Predicated region
    $region21: #{conv_layer_forward.1} parent=5 // pred_check
      %p141 = pneg %p140
    $region22: #{conv_layer_forward.1} parent=5 // pred_check_branch
      %143 = sbr.rel (%p141) target = $region24
    $region23: #{conv_layer_forward.1} parent=5 // pred_region
      // Predicated region
      $region25: #{conv_layer_forward.1} parent=23 // pred_check
        %p144 = pneg %p43
      $region26: #{conv_layer_forward.1} parent=23 // pred_check_branch
        %146 = sbr.rel (%p144) target = $region28
      $region27: #{conv_layer_forward.1} parent=23 // pred_region
        %s147 = smul.u32 8, %s17
        %p148 = scmp.lt.s32.totalorder %s16, 1
        %s149 = scalar_select %p148, %s16, 1
        %p150 = scmp.lt.s32.totalorder %s147, 7
        %s151 = scalar_select %p150, %s147, 7
        %s152 = smul.addr %s149, 8
        %s153 = sadd.s32 %s151, %s152
        %s154 = smul.addr %s153, 4
        %s155 = scalar_lea.vmem %s0, %s154
        %s156 = smul.u32 8, %s17
      $region28: #{conv_layer_forward.1} parent=23 // pred_fallthru
        _
    $region24: #{conv_layer_forward.1} parent=5 // pred_fallthru
      _
    %p157 = scmp.le.s32.totalorder 1, %s9
    %p158 = scmp.lt.s32.totalorder %s9, 3
    %p159 = pnand %p157, %p158
    %p160 = pneg %p159
    // Predicated region
    $region29: #{conv_layer_forward.1} parent=5 // pred_check
      _
    $region30: #{conv_layer_forward.1} parent=5 // pred_check_branch
      %162 = sbr.rel (%p159) target = $region32
    $region31: #{conv_layer_forward.1} parent=5 // pred_region
      %s163 = ssub.s32 %s9, 1
      %s164 = smul.u32 8, %s19
      %p165 = scmp.lt.s32.totalorder %s18, 1
      %s166 = scalar_select %p165, %s18, 1
      %p167 = scmp.lt.s32.totalorder %s164, 7
      %s168 = scalar_select %p167, %s164, 7
      %s169 = smul.addr %s166, 8
      %s170 = sadd.s32 %s168, %s169
      %s171 = smul.addr %s170, 4
      %s172 = scalar_lea.vmem %s0, %s171
      %p173 = pneg %p49
      %p174 = pneg %p46
      %p175 = pneg %p70
      %p176 = pneg %p67
      %p177 = pneg %p91
      %p178 = pneg %p88
      %p179 = pneg %p119
      %p180 = pneg %p116
      %s181 = smul.u32 8, %s19
      %p182 = scmp.lt.s32.totalorder %s18, 1
      %s183 = scalar_select %p182, %s18, 1
      %p184 = scmp.lt.s32.totalorder %s181, 7
      %s185 = scalar_select %p184, %s181, 7
      %s186 = smul.addr %s183, 8
      %s187 = sadd.s32 %s185, %s186
      %s188 = smul.addr %s187, 8
      %s189 = scalar_lea.vmem %s3, %s188
      %s190 = smul.u32 8, %s19
      %p191 = scmp.lt.s32.totalorder %s18, 1
      %s192 = scalar_select %p191, %s18, 1
      %p193 = scmp.lt.s32.totalorder %s190, 7
      %s194 = scalar_select %p193, %s190, 7
      %s195 = smul.addr %s192, 8
      %s196 = sadd.s32 %s194, %s195
      %s197 = smul.addr %s196, 4
      %s198 = scalar_lea.vmem %s0, %s197
      %s199 = smul.u32 8, %s19
      %s200 = smul.u32 8, %s19
      %p201 = scmp.lt.s32.totalorder %s18, 1
      %s202 = scalar_select %p201, %s18, 1
      %p203 = scmp.lt.s32.totalorder %s200, 7
      %s204 = scalar_select %p203, %s200, 7
      %s205 = smul.addr %s202, 8
      %s206 = sadd.s32 %s204, %s205
      %s207 = smul.addr %s206, 8
      %s208 = scalar_lea.vmem %s3, %s207
      %s209 = smul.u32 8, %s19
      %v210 = vld [vmem:[%s198] sm:$0xf]
      %v211 = vld [vmem:[%s198 + $0x4] sm:$0xf]
      %v212 = vld [vmem:[%s198 + $0x8] sm:$0xf]
      %v213 = vld [vmem:[%s198 + $0xc] sm:$0xf]
      %v214 = vld [vmem:[%s198 + $0x10] sm:$0xf]
      %v215 = vld [vmem:[%s198 + $0x14] sm:$0xf]
      %v216 = vld [vmem:[%s198 + $0x18] sm:$0xf]
      %v217 = vld [vmem:[%s198 + $0x1c] sm:$0xf]
      %v218 = vld [vmem:[%s1] sm:$0xf]
      %v219 = vld [vmem:[%s1 + $0x4] sm:$0xf]
      %v220 = vld [vmem:[%s1 + $0x8] sm:$0xf]
      %v221 = vld [vmem:[%s1 + $0xc] sm:$0xf]
      %v222 = vld [vmem:[%s1 + $0x10] sm:$0xf]
      %v223 = vld [vmem:[%s1 + $0x14] sm:$0xf]
      %v224 = vld [vmem:[%s1 + $0x18] sm:$0xf]
      %v225 = vld [vmem:[%s1 + $0x1c] sm:$0xf]
      %v226 = vld [vmem:[%s1 + $0x20] sm:$0xf]
      %v227 = vld [vmem:[%s1 + $0x24] sm:$0xf]
      %v228 = vld [vmem:[%s1 + $0x28] sm:$0xf]
      %v229 = vld [vmem:[%s1 + $0x2c] sm:$0xf]
      %v230 = vld [vmem:[%s1 + $0x30] sm:$0xf]
      %v231 = vld [vmem:[%s1 + $0x34] sm:$0xf]
      %v232 = vld [vmem:[%s1 + $0x38] sm:$0xf]
      %v233 = vld [vmem:[%s1 + $0x3c] sm:$0xf]
      %v234 = vld [vmem:[%s2] sm:$0x1]
      %v236 = vperm.slane %v234, 0
      %v246 = vunpack.c.l.b16 %v210
      %v247 = vunpack.c.l.b16 %v211
      %v248 = vunpack.c.l.b16 %v212
      %v249 = vunpack.c.l.b16 %v213
      %v250 = vunpack.c.l.b16 %v214
      %v251 = vunpack.c.l.b16 %v215
      %v252 = vunpack.c.l.b16 %v216
      %v253 = vunpack.c.l.b16 %v217
      %v254 = vpack.c.b16 %v247, %v246
      %v255 = vpack.c.b16 %v249, %v248
      %v256 = vpack.c.b16 %v251, %v250
      %v257 = vpack.c.b16 %v253, %v252
      %v278 = vunpack.c.l.b16 %v218
      %v279 = vunpack.c.l.b16 %v219
      %v280 = vunpack.c.l.b16 %v220
      %v281 = vunpack.c.l.b16 %v221
      %v282 = vunpack.c.l.b16 %v222
      %v283 = vunpack.c.l.b16 %v223
      %v284 = vunpack.c.l.b16 %v224
      %v285 = vunpack.c.l.b16 %v225
      %v286 = vunpack.c.l.b16 %v226
      %v287 = vunpack.c.l.b16 %v227
      %v288 = vunpack.c.l.b16 %v228
      %v289 = vunpack.c.l.b16 %v229
      %v290 = vunpack.c.l.b16 %v230
      %v291 = vunpack.c.l.b16 %v231
      %v292 = vunpack.c.l.b16 %v232
      %v293 = vunpack.c.l.b16 %v233
      %v294 = vpack.c.b16 %v279, %v278
      %v295 = vpack.c.b16 %v281, %v280
      %v296 = vpack.c.b16 %v283, %v282
      %v297 = vpack.c.b16 %v285, %v284
      %v298 = vpack.c.b16 %v287, %v286
      %v299 = vpack.c.b16 %v289, %v288
      %v300 = vpack.c.b16 %v291, %v290
      %v301 = vpack.c.b16 %v293, %v292
      %310 = vmatpush.bf16.msra.mxu0 %v301
      %311 = vmatpush.bf16.msra.mxu0 %v300
      %312 = vmatpush.bf16.msra.mxu0 %v299
      %313 = vmatpush.bf16.msra.mxu0 %v298
      %314 = vmatpush.bf16.msra.mxu0 %v297
      %315 = vmatpush.bf16.msra.mxu0 %v296
      %316 = vmatpush.bf16.msra.mxu0 %v295
      %317 = vmatpush.bf16.msra.mxu0 %v294
      %318 = vmatmul.bf16.gmra.mxu0 %v254
      %v319 = vpop.f32.mrf.mxu0
      %v320 = vadd.f32 %v236, %v319
      %v321 = vpop.f32.mrf.mxu0
      %v322 = vadd.f32 %v236, %v321
      %323 = vmatmul.bf16.gmra.mxu0 %v255
      %v324 = vpop.f32.mrf.mxu0
      %v325 = vadd.f32 %v236, %v324
      %v326 = vpop.f32.mrf.mxu0
      %v327 = vadd.f32 %v236, %v326
      %328 = vmatmul.bf16.gmra.mxu0 %v256
      %v329 = vpop.f32.mrf.mxu0
      %v330 = vadd.f32 %v236, %v329
      %v331 = vpop.f32.mrf.mxu0
      %v332 = vadd.f32 %v236, %v331
      %333 = vmatmul.bf16.gmra.mxu0 %v257
      %v334 = vpop.f32.mrf.mxu0
      %v335 = vadd.f32 %v236, %v334
      %v336 = vpop.f32.mrf.mxu0
      %v337 = vadd.f32 %v236, %v336
      %338 = vdwg.mxu0
      %339 = vst [vmem:[%s208] sm:$0xff] %v320
      %340 = vst [vmem:[%s208 + $0x8] sm:$0xff] %v322
      %341 = vst [vmem:[%s208 + $0x10] sm:$0xff] %v325
      %342 = vst [vmem:[%s208 + $0x18] sm:$0xff] %v327
      %343 = vst [vmem:[%s208 + $0x20] sm:$0xff] %v330
      %344 = vst [vmem:[%s208 + $0x28] sm:$0xff] %v332
      %345 = vst [vmem:[%s208 + $0x30] sm:$0xff] %v335
      %346 = vst [vmem:[%s208 + $0x38] sm:$0xff] %v337
      %s347 = smul.u32 8, %s19
      %p348 = scmp.lt.s32.totalorder %s18, 1
      %s349 = scalar_select %p348, %s18, 1
      %p350 = scmp.lt.s32.totalorder %s347, 7
      %s351 = scalar_select %p350, %s347, 7
      %s352 = smul.addr %s349, 8
      %s353 = sadd.s32 %s351, %s352
      %s354 = smul.addr %s353, 8
      %s355 = scalar_lea.vmem %s3, %s354
      // Predicated region
      $region33: #{conv_layer_forward.1} parent=31 // pred_check
        %p356 = pneg %p116
      $region34: #{conv_layer_forward.1} parent=31 // pred_check_branch
        %358 = sbr.rel (%p356) target = $region36
      $region35: #{conv_layer_forward.1} parent=31 // pred_region
        %s359 = smul.u32 8, %s19
      $region36: #{conv_layer_forward.1} parent=31 // pred_fallthru
        _
    $region32: #{conv_layer_forward.1} parent=5 // pred_fallthru
      _
    %p360 = scmp.le.s32.totalorder 2, %s9
    // Predicated region
    $region37: #{conv_layer_forward.1} parent=5 // pred_check
      %p361 = pneg %p360
    $region38: #{conv_layer_forward.1} parent=5 // pred_check_branch
      %363 = sbr.rel (%p361) target = $region40
    $region39: #{conv_layer_forward.1} parent=5 // pred_region
      %s364 = ssub.s32 %s9, 2
      // Predicated region
      $region41: #{conv_layer_forward.1} parent=39 // pred_check
        %p365 = pneg %p122
      $region42: #{conv_layer_forward.1} parent=39 // pred_check_branch
        %367 = sbr.rel (%p365) target = $region44
      $region43: #{conv_layer_forward.1} parent=39 // pred_region
        %s368 = smul.u32 8, %s21
        %p369 = scmp.lt.s32.totalorder %s20, 1
        %s370 = scalar_select %p369, %s20, 1
        %p371 = scmp.lt.s32.totalorder %s368, 7
        %s372 = scalar_select %p371, %s368, 7
        %s373 = smul.addr %s370, 8
        %s374 = sadd.s32 %s372, %s373
        %s375 = smul.addr %s374, 8
        %s376 = scalar_lea.vmem %s3, %s375
      $region44: #{conv_layer_forward.1} parent=39 // pred_fallthru
        _
    $region40: #{conv_layer_forward.1} parent=5 // pred_fallthru
      _
  $region6: #{conv_layer_forward.1} parent=0 // loop_footer
    %s13 = sadd.s32 1, %s9
  $region7: #{conv_layer_forward.1} parent=0 // loop_footer_branch
    %8 = sbr.rel target = $region3
  $region8: #{conv_layer_forward.1} parent=0 // loop_exit
    _

</llo_original>
